<compile_context>
chip_gen: v5e
topology: v5e:2x2
jax: 0.10.0
libtpu: 0.0.40
codegen_flags: <defaults>
</compile_context>

<pallas_src>
import functools

import jax
import jax.numpy as jnp
from jax.experimental import pallas as pl
from jax.experimental.pallas import tpu as pltpu


def _wce_kernel(slab_ref, loss_ref):
    # slab_ref: (C+2, TN) float32
    #   rows 0..C-1 : logits   (classes on sublanes, anchors on lanes)
    #   row  C      : label index (exact small integer stored as f32)
    #   row  C+1    : anchor weight
    # loss_ref: (1, TN) float32
    c = slab_ref.shape[0] - 2
    logits = slab_ref[0:c, :]                          # (C, TN) f32
    labels = slab_ref[c:c + 1, :].astype(jnp.int32)    # (1, TN) exact small ints
    w = slab_ref[c + 1:c + 2, :]                       # (1, TN)

    # numerically stable log-sum-exp over the class (sublane) axis
    m = jnp.max(logits, axis=0, keepdims=True)                                  # (1, TN)
    lse = m + jnp.log(jnp.sum(jnp.exp(logits - m), axis=0, keepdims=True))      # (1, TN)

    # pick logits[label] per anchor: sublane iota == label, sublane-sum (cheap VPU/XLU filler)
    cls = jax.lax.broadcasted_iota(jnp.int32, logits.shape, 0)                  # (C, TN)
    sel = jnp.sum(jnp.where(cls == labels, logits, 0.0), axis=0, keepdims=True)

    loss_ref[...] = ((lse - sel) * w).astype(loss_ref.dtype)


def _round_up(x, m):
    return (x + m - 1) // m * m


@functools.partial(jax.jit, static_argnames=("tile_lanes",))
def weighted_cross_entropy_loss(logits, target, weights, *, tile_lanes=65536):
    """
    Args:
      logits:  (B, A, C) float logits.
      target:  (B, A, C) float one-hot targets.
      weights: (B, A)    float anchor-wise weights.
    Returns:
      loss: (B, A) float32, un-reduced weighted CE (matches the PyTorch module).
    """
    B, A, C = logits.shape
    N = B * A

    # ---- grid / tile sizing (all static Python ints under jit) --------------------------
    n128 = _round_up(N, 128)
    g = max(1, -(-n128 // tile_lanes))        # steps needed to keep tiles <= tile_lanes
    if n128 >= 256:                           # give both v7x TensorCores work
        g = max(g, 2)
        g += g % 2                            # even step count
    tn = _round_up(-(-n128 // g), 128)        # lane tile, multiple of 128
    n_pad = tn * g                            # total padding bounded by < 128 * g lanes

    # ---- build the packed (C+2, N_pad) slab: one fused reshape/transpose/concat/pad -----
    # argmax reproduces torch's target.argmax(dim=-1); the one-hot tensor never reaches the
    # kernel's HBM traffic.
    logits_f = logits.reshape(N, C).astype(jnp.float32)
    labels = jnp.argmax(target.reshape(N, C), axis=-1).astype(jnp.float32)
    w = weights.reshape(N).astype(jnp.float32)
    slab = jnp.concatenate([logits_f.T, labels[None, :], w[None, :]], axis=0)   # (C+2, N)
    slab = jnp.pad(slab, ((0, 0), (0, n_pad - N)))

    # ---- VMEM budget + scheduler cost hint ----------------------------------------------
    slab_rows = _round_up(C + 2, 8)
    block_bytes = (slab_rows + 8) * tn * 4          # slab block + (1->8 sublane) out block
    vmem_limit = int(min(max(4 * block_bytes + (2 << 20), 16 << 20), 48 << 20))
    cost = pl.CostEstimate(
        flops=int((4 * C + 6) * n_pad),
        transcendentals=int((C + 1) * n_pad),
        bytes_accessed=int((C + 3) * 4 * n_pad),
    )

    out = pl.pallas_call(
        _wce_kernel,
        out_shape=jax.ShapeDtypeStruct((1, n_pad), jnp.float32),
        grid_spec=pltpu.PrefetchScalarGridSpec(
            num_scalar_prefetch=0,
            grid=(g,),
            in_specs=[pl.BlockSpec((C + 2, tn), lambda i: (0, i))],   # packed slab, lane-dense
            out_specs=pl.BlockSpec((1, tn), lambda i: (0, i)),
        ),
        compiler_params=pltpu.CompilerParams(
            dimension_semantics=("parallel",),
            vmem_limit_bytes=vmem_limit,
            allow_input_fusion=[True],
        ),
        cost_estimate=cost,
    )(slab)

    return out[0, :N].reshape(B, A)


def _reference(logits, target, weights):
    # pure-JAX reference for sanity check
    lse = jax.nn.logsumexp(logits.astype(jnp.float32), axis=-1)
    idx = jnp.argmax(target, axis=-1)
    sel = jnp.take_along_axis(logits.astype(jnp.float32), idx[..., None], axis=-1)[..., 0]
    return (lse - sel) * weights.astype(jnp.float32)


if __name__ == "__main__":
    key = jax.random.PRNGKey(0)
    B, A, C = 2, 16, 4   # batch, #anchors, #classes

    k1, k2, k3 = jax.random.split(key, 3)
    logits = jax.random.normal(k1, (B, A, C), dtype=jnp.float32)
    hard_labels = jax.random.randint(k2, (B, A), 0, C)
    target = jax.nn.one_hot(hard_labels, C, dtype=jnp.float32)
    weights = jax.random.uniform(k3, (B, A), dtype=jnp.float32)

    loss = weighted_cross_entropy_loss(logits, target, weights)
    loss = jax.block_until_ready(loss)

    ref = _reference(logits, target, weights)
    assert loss.shape == (B, A)
    assert jnp.allclose(loss, ref, atol=1e-5, rtol=1e-5), (loss, ref)

    print("KERNEL_OK")
</pallas_src>

<mosaic_0001>
module attributes {stable_mosaic.version = 11 : i64} {
  func.func @_wce_kernel(%arg0: i32, %arg1: memref<6x128xf32, #tpu.memory_space<vmem>>, %arg2: memref<1x128xf32, #tpu.memory_space<vmem>>) attributes {dimension_semantics = [#tpu.dimension_semantics<parallel>], iteration_bounds = array<i64: 1>, scalar_prefetch = 0 : i64, scratch_operands = 0 : i64, tpu.core_type = #tpu.core_type<tc>, window_params = [{transform_indices = @transform_0, window_bounds = array<i64: 6, 128>}, {transform_indices = @transform_1, window_bounds = array<i64: 1, 128>}]} {
    %c0 = arith.constant 0 : index
    %c0_0 = arith.constant 0 : index
    %0 = vector.load %arg1[%c0, %c0_0] : memref<6x128xf32, #tpu.memory_space<vmem>>, vector<4x128xf32>
    %c4 = arith.constant 4 : index
    %c0_1 = arith.constant 0 : index
    %1 = vector.load %arg1[%c4, %c0_1] : memref<6x128xf32, #tpu.memory_space<vmem>>, vector<1x128xf32>
    %2 = arith.fptosi %1 : vector<1x128xf32> to vector<1x128xi32>
    %c5 = arith.constant 5 : index
    %c0_2 = arith.constant 0 : index
    %3 = vector.load %arg1[%c5, %c0_2] : memref<6x128xf32, #tpu.memory_space<vmem>>, vector<1x128xf32>
    %cst = arith.constant dense<0xFF800000> : vector<128xf32>
    %4 = vector.multi_reduction <maximumf>, %0, %cst [0] : vector<4x128xf32> to vector<128xf32>
    %5 = vector.shape_cast %4 : vector<128xf32> to vector<1x128xf32>
    %6 = vector.broadcast %5 : vector<1x128xf32> to vector<4x128xf32>
    %7 = arith.subf %0, %6 : vector<4x128xf32>
    %8 = math.exp %7 : vector<4x128xf32>
    %cst_3 = arith.constant dense<0.000000e+00> : vector<128xf32>
    %9 = vector.multi_reduction <add>, %8, %cst_3 [0] : vector<4x128xf32> to vector<128xf32>
    %10 = vector.shape_cast %9 : vector<128xf32> to vector<1x128xf32>
    %11 = math.log %10 : vector<1x128xf32>
    %12 = arith.addf %5, %11 : vector<1x128xf32>
    %13 = tpu.iota {dimensions = array<i32: 0>} : vector<4x128xi32>
    %14 = vector.broadcast %2 : vector<1x128xi32> to vector<4x128xi32>
    %15 = arith.cmpi eq, %13, %14 : vector<4x128xi32>
    %cst_4 = arith.constant 0.000000e+00 : f32
    %16 = vector.broadcast %cst_4 : f32 to vector<4x128xf32>
    %17 = arith.select %15, %0, %16 : vector<4x128xi1>, vector<4x128xf32>
    %cst_5 = arith.constant dense<0.000000e+00> : vector<128xf32>
    %18 = vector.multi_reduction <add>, %17, %cst_5 [0] : vector<4x128xf32> to vector<128xf32>
    %19 = vector.shape_cast %18 : vector<128xf32> to vector<1x128xf32>
    %20 = arith.subf %12, %19 : vector<1x128xf32>
    %21 = arith.mulf %20, %3 : vector<1x128xf32>
    %c0_6 = arith.constant 0 : index
    %c0_7 = arith.constant 0 : index
    %22 = vector.load %arg2[%c0_6, %c0_7] : memref<1x128xf32, #tpu.memory_space<vmem>>, vector<1x128xf32>
    tpu.vector_store %arg2[%c0_6, %c0_7], %21 {strides = array<i32>} : memref<1x128xf32, #tpu.memory_space<vmem>>, vector<1x128xf32>,
    return
  }
  func.func @transform_0(%arg0: i32) -> (i32, i32) {
    %c0_i32 = arith.constant 0 : i32
    %c0_i32_0 = arith.constant 0 : i32
    return %c0_i32, %arg0 : i32, i32
  }
  func.func @transform_1(%arg0: i32) -> (i32, i32) {
    %c0_i32 = arith.constant 0 : i32
    %c0_i32_0 = arith.constant 0 : i32
    return %c0_i32, %arg0 : i32, i32
  }
}

</mosaic_0001>

<llo_original>
// kernel: squeeze.1
$region0: #{squeeze.1}
  %s0 = inlined_call_operand.vmem [shape: f32[32], index: 0, kind: input, shape index: {}]
  %s1 = inlined_call_operand.hbm [shape: f32[2,16], index: 1, kind: output, shape index: {}]
  $region1: #{squeeze.1} parent=0
    #allocation0 [shape = 'u8[1024]{0}', space=vmem, size = 0x400, scoped, tag = 'operand span for operand 1']
    #allocation1 [shape = 's32[1]{0}', space=sflag, size = 0x4, scoped, tag = 'scoped memory for squeeze.1']
    #allocation2 [shape = 'u8[4096]{0}', space=vmem, size = 0x1000, scoped, tag = 'scoped mem for output reshape']
    #allocation3 [shape = 'u8[4096]{0}', space=vmem, size = 0x1000, scoped, tag = 'scoped mem for input reshape']
    %2 = vsyncpa [#allocation1], 0
    %s4 = ssub.s32 2, 1
    %v5 = vld [vmem:[%s0] sm:%s4]
    %6 = vst [vmem:[#allocation3] sm:%s4] %v5
    %v7 = vld [vmem:[#allocation3] sm:$0x1]
    %vm8 = vcmask 130048
    %9 = vst.msk [vmem:[#allocation2] sm:$0x1] %vm8, %v7
    %v10 = vld [vmem:[#allocation3] sm:$0x1]
    %11 = vrot.lane.b32.xlu0 %v10, 112
    %v12 = vpop.permute.xlu0 %11
    %vm13 = vcmask 130048
    %s14 = scalar_lea.vmem [#allocation2], 1
    %15 = vst.msk [vmem:[%s14] sm:$0x1] %vm13, %v12
    %s17 = ssub.s32 4, 1
    %v18 = vld [vmem:[#allocation2] sm:%s17]
    %s20 = ssub.s32 4, 1
    %21 = vst [vmem:[#allocation0] sm:%s20] %v18
    %23 = vsyncadd [#allocation1], 0
    %s25 = sshll.u32 [#allocation0], 4
    %s26 = int_to_ptr.vmem [resolvable:$true] %s25
    %s27 = sshll.u32 %s1, 4
    %s28 = int_to_ptr.hbm [resolvable:$true] %s27
    %30 = dma.vmem_to_hbm [thread:$0]  %s26, 32, %s28, [#allocation1]
    %32 = dma.done [#allocation1], 32
    %33 = vsyncpa [#allocation1], 1

// kernel: weighted_cross_entropy_loss.2
$region0: #{weighted_cross_entropy_loss.2}
  #allocation0 [shape = 'u32[]', space=smem, size = 0x4, offset = 0x4, fixed_abs, tag = 'smem constant byte address 0x4 - core index']
  #allocation1 [shape = 'u32[72,128]{1,0:T(1,128)}', space=vmem, size = 0x9000, scoped, tag = 'internal scratch']
  #allocation2 [shape = 'u32[2048]{0}', space=vmem, size = 0x2000, scoped, tag = 'scoped memory for weighted_cross_entropy_loss.2']
  #allocation3 [shape = 'u32[2048]{0}', space=vmem, size = 0x2000, scoped, tag = 'scoped memory for weighted_cross_entropy_loss.2']
  #allocation4 [shape = 'u32[2048]{0}', space=vmem, size = 0x2000, scoped, tag = 'scoped memory for weighted_cross_entropy_loss.2']
  #allocation5 [shape = 'u32[2048]{0}', space=vmem, size = 0x2000, scoped, tag = 'scoped memory for weighted_cross_entropy_loss.2']
  #allocation6 [shape = 'u32[2048]{0}', space=vmem, size = 0x2000, scoped, tag = 'scoped memory for weighted_cross_entropy_loss.2']
  #allocation7 [shape = 'u32[2048]{0}', space=vmem, size = 0x2000, scoped, tag = 'scoped memory for weighted_cross_entropy_loss.2']
  #allocation8 [shape = 'u32[2048]{0}', space=vmem, size = 0x2000, scoped, tag = 'scoped memory for weighted_cross_entropy_loss.2']
  #allocation9 [shape = 'u32[2048]{0}', space=vmem, size = 0x2000, scoped, tag = 'scoped memory for weighted_cross_entropy_loss.2']
  #allocation10 [shape = 'u32[2048]{0}', space=vmem, size = 0x2000, scoped, tag = 'scoped memory for weighted_cross_entropy_loss.2']
  #allocation11 [shape = 'u32[2048]{0}', space=vmem, size = 0x2000, scoped, tag = 'scoped memory for weighted_cross_entropy_loss.2']
  #allocation12 [shape = 'u32[2048]{0}', space=vmem, size = 0x2000, scoped, tag = 'scoped memory for weighted_cross_entropy_loss.2']
  #allocation13 [shape = 'u32[2048]{0}', space=vmem, size = 0x2000, scoped, tag = 'scoped memory for weighted_cross_entropy_loss.2']
  #allocation14 [shape = 'u32[2048]{0}', space=vmem, size = 0x2000, scoped, tag = 'scoped memory for weighted_cross_entropy_loss.2']
  #allocation15 [shape = 'u32[2048]{0}', space=vmem, size = 0x2000, scoped, tag = 'scoped memory for weighted_cross_entropy_loss.2']
  #allocation16 [shape = 'u32[2048]{0}', space=vmem, size = 0x2000, scoped, tag = 'scoped memory for weighted_cross_entropy_loss.2']
  %s0 = inlined_call_operand.vmem [shape: f32[1,32], index: 0, kind: input, shape index: {}]
  %s1 = inlined_call_operand.<no memory space> [shape: f32[], index: 1, kind: input, shape index: {}]
  %s2 = inlined_call_operand.vmem [shape: f32[1,32], index: 2, kind: input, shape index: {}]
  %s3 = inlined_call_operand.vmem [shape: f32[4,32], index: 3, kind: input, shape index: {}]
  %s4 = inlined_call_operand.<no memory space> [shape: f32[], index: 4, kind: input, shape index: {}]
  %s5 = inlined_call_operand.<no memory space> [shape: s32[], index: 5, kind: input, shape index: {}]
  %s6 = inlined_call_operand.vmem [shape: f32[1,128], index: 6, kind: output, shape index: {}]
  %s7 = sld [smem:[#allocation0]]
  $region22: #{weighted_cross_entropy_loss.2} parent=0
    _
  %s9 = ssub.s32 1, %s7
  %s10 = scalar_select 0, %s9, %s7
  %v11 = vstv %s1
  %v12 = vstv %s1
  %v13 = vstv %s1
  %v14 = vstv %s4
  %v15 = vstv %s5
  $region1: #{weighted_cross_entropy_loss.2} parent=0
    #allocation17 [shape = 'u8[4096]{0}', space=vmem, size = 0x1000, dematerialized = true, scoped, tag = 'FusionAdapter Buffer %select_maximum_fusion.1 = f32[6,128]{1,0:T(8,128)} fusion(%param_0.23, %param_1.21, %param_2.14, %param_3.12, %param_4.10, %param_5.14), kind=kLoop, calls=%fused_computation.clone.clone, metadata={op_name="jit(weighted_cross_entropy_loss)/concatenate" stack_frame_id=14}']
    // Predicated region
    $region2: #{weighted_cross_entropy_loss.2} parent=1 // pred_check
      _
    $region3: #{weighted_cross_entropy_loss.2} parent=1 // pred_check_branch
      %17 = sbr.rel (0) target = $region5
    $region4: #{weighted_cross_entropy_loss.2} parent=1 // pred_region
      %s19 = ssub.s32 1, 0
      %p20 = scmp.lt.s32.totalorder 0, 0
      %s21 = scalar_select %p20, 0, 0
      %s22 = scalar_lea.vmem %s0, %s21
      %s24 = ssub.s32 1, 0
    $region5: #{weighted_cross_entropy_loss.2} parent=1 // pred_fallthru
      _
    // Predicated region
    $region6: #{weighted_cross_entropy_loss.2} parent=1 // pred_check
      _
    $region7: #{weighted_cross_entropy_loss.2} parent=1 // pred_check_branch
      %26 = sbr.rel (0) target = $region9
    $region8: #{weighted_cross_entropy_loss.2} parent=1 // pred_region
      %s28 = ssub.s32 1, 0
      %p29 = scmp.lt.s32.totalorder 0, 0
      %s30 = scalar_select %p29, 0, 0
      %s31 = scalar_lea.vmem %s2, %s30
      %s33 = ssub.s32 1, 0
    $region9: #{weighted_cross_entropy_loss.2} parent=1 // pred_fallthru
      _
    // Predicated region
    $region10: #{weighted_cross_entropy_loss.2} parent=1 // pred_check
      _
    $region11: #{weighted_cross_entropy_loss.2} parent=1 // pred_check_branch
      %35 = sbr.rel (0) target = $region13
    $region12: #{weighted_cross_entropy_loss.2} parent=1 // pred_region
      _
    $region13: #{weighted_cross_entropy_loss.2} parent=1 // pred_fallthru
      _
    %s37 = ssub.s32 1, 0
    %p38 = scmp.lt.s32.totalorder 0, 0
    %s39 = scalar_select %p38, 0, 0
    %s40 = scalar_lea.vmem %s0, %s39
    %s42 = ssub.s32 1, 0
    %p43 = scmp.lt.s32.totalorder 0, 0
    %s44 = scalar_select %p43, 0, 0
    %s45 = scalar_lea.vmem %s2, %s44
    %s47 = ssub.s32 1, 0
    %p48 = scmp.lt.s32.totalorder 0, 0
    %s49 = scalar_select %p48, 0, 0
    %s50 = scalar_lea.vmem %s0, %s49
    %s52 = ssub.s32 1, 0
    %s54 = ssub.s32 1, 0
    %p55 = scmp.lt.s32.totalorder 0, 0
    %s56 = scalar_select %p55, 0, 0
    %s57 = scalar_lea.vmem %s2, %s56
    %s59 = ssub.s32 1, 0
    %s60 = ssub.s32 0, 0
    %p61 = scmp.lt.s32.totalorder %s60, 0
    %s62 = scalar_select %p61, 0, 255
    %s63 = sand.u32 1, %s62
    %s64 = sand.u32 1, %s63
    %v65 = vld [vmem:[%s50] sm:%s64]
    %v66 = vlaneseq
    %v67 = vshrl.u32 %v66, 7
    %v68 = vadd.s32 %v67, 8
    %vm69 = vcmp.lt.s32.totalorder %v68, 9
    %v70 = vsel %vm69, %v65, %v11
    %v71 = vlaneseq
    %v72 = vand.u32 %v71, 127
    %vm74 = vcmp.lt.s32.totalorder %v72, 32
    %v75 = vsel %vm74, %v70, %v11
    %vm76 = vcmask 1042432
    %v77 = vsel %vm76, %v75, %v11
    %v78 = vrot.slane %v77, 3
    %s79 = ssub.s32 0, 0
    %p80 = scmp.lt.s32.totalorder %s79, 0
    %s81 = scalar_select %p80, 0, 255
    %s82 = sand.u32 1, %s81
    %s83 = sand.u32 1, %s82
    %v84 = vld [vmem:[%s57] sm:%s83]
    %v85 = vlaneseq
    %v86 = vshrl.u32 %v85, 7
    %v87 = vadd.s32 %v86, 8
    %vm88 = vcmp.lt.s32.totalorder %v87, 9
    %v89 = vsel %vm88, %v84, %v12
    %v90 = vlaneseq
    %v91 = vand.u32 %v90, 127
    %vm93 = vcmp.lt.s32.totalorder %v91, 32
    %v94 = vsel %vm93, %v89, %v12
    %vm95 = vcmask 1043456
    %v96 = vsel %vm95, %v94, %v12
    %v97 = vrot.slane %v96, 4
    %v98 = vld [vmem:[%s3] sm:$0xf]
    %v99 = vlaneseq
    %v100 = vshrl.u32 %v99, 7
    %vm102 = vcmp.lt.s32.totalorder %v100, 4
    %v103 = vsel %vm102, %v98, %v13
    %v104 = vlaneseq
    %v105 = vand.u32 %v104, 127
    %vm107 = vcmp.lt.s32.totalorder %v105, 32
    %v108 = vsel %vm107, %v103, %v13
    %v109 = vlaneseq
    %v110 = vand.u32 %v109, 127
    %113 = xla_tuple %v110, %v15
    %114 = xla_tuple %113
    %vm115 = vcmp.lt.s32.totalorder %v110, %v15
    %v116 = vsel %vm115, 1, 0
    %117 = xla_tuple %v116
    %118 = xla_tuple %v116, %v108, %v14
    %119 = xla_tuple %118
    %v120 = vsel %vm115, %v108, %v14
    %121 = xla_tuple %v120
    %122 = xla_tuple %v116, %v97, %v14
    %123 = xla_tuple %122
    %v124 = vsel %vm115, %v97, %v14
    %125 = xla_tuple %v124
    %126 = xla_tuple %v120, %v124
    %127 = xla_tuple %126
    %v128 = vmax.f32 %v120, %v124
    %129 = xla_tuple %v128
    %130 = xla_tuple %v116, %v78, %v14
    %131 = xla_tuple %130
    %v132 = vsel %vm115, %v78, %v14
    %133 = xla_tuple %v132
    %134 = xla_tuple %v128, %v132
    %135 = xla_tuple %134
    %v136 = vmax.f32 %v128, %v132
    %137 = xla_tuple %v136
    %s139 = ssub.s32 256, 1
    %140 = vst [vmem:[#allocation17] sm:%s139] %v136
    %v141 = vld [vmem:[#allocation17] sm:$0xf]
    %v142 = vld [vmem:[#allocation17 + $0x4] sm:$0x1]
    %v143 = vcvt.f32.s32.to.zero.pseudo %v142
    %v144 = vld [vmem:[#allocation17 + $0x5] sm:$0x1]
    %vm145 = vcmask 1043456
    %v146 = vsel %vm145, %v141, -inf
    %v147 = vrot.slane %v146, 4
    %v148 = vmax.f32 %v146, %v147
    %v149 = vrot.slane %v148, 2
    %v150 = vmax.f32 %v148, %v149
    %v151 = vrot.slane %v150, 1
    %v152 = vmax.f32 %v150, %v151
    %v153 = vsub.f32 %v141, %v152
    %v154 = vmul.f32 %v153, 1.442695
    %v155 = vpow.pop %v154
    %v156 = vsel %vm145, %v155, 0.0
    %v157 = vrot.slane %v156, 4
    %v158 = vadd.f32 %v156, %v157
    %v159 = vrot.slane %v158, 2
    %v160 = vadd.f32 %v158, %v159
    %v161 = vrot.slane %v160, 1
    %v162 = vadd.f32 %v160, %v161
    %v163 = vlog2.pop %v162
    %v164 = vmul.f32 %v163, 0.6931472
    %v165 = vadd.f32 %v152, %v164
    %v166 = vlaneseq
    %v167 = vshrl.u32 %v166, 7
    %v168 = vperm.slane %v143, 0
    %vm169 = vcmp.eq.s32.totalorder %v167, %v168
    %v170 = vsel %vm169, %v141, 0.0
    %v171 = vsel %vm145, %v170, 0.0
    %v172 = vrot.slane %v171, 4
    %v173 = vadd.f32 %v171, %v172
    %v174 = vrot.slane %v173, 2
    %v175 = vadd.f32 %v173, %v174
    %v176 = vrot.slane %v175, 1
    %v177 = vadd.f32 %v175, %v176
    %v178 = vsub.f32 %v165, %v177
    %v179 = vmul.f32 %v178, %v144
    %180 = vst [vmem:[%s6] sm:$0x1] %v179
    // Predicated region
    $region14: #{weighted_cross_entropy_loss.2} parent=1 // pred_check
      _
    $region15: #{weighted_cross_entropy_loss.2} parent=1 // pred_check_branch
      %182 = sbr.rel (0) target = $region17
    $region16: #{weighted_cross_entropy_loss.2} parent=1 // pred_region
      _
    $region17: #{weighted_cross_entropy_loss.2} parent=1 // pred_fallthru
      _
    // Predicated region
    $region18: #{weighted_cross_entropy_loss.2} parent=1 // pred_check
      _
    $region19: #{weighted_cross_entropy_loss.2} parent=1 // pred_check_branch
      %184 = sbr.rel (0) target = $region21
    $region20: #{weighted_cross_entropy_loss.2} parent=1 // pred_region
      _
    $region21: #{weighted_cross_entropy_loss.2} parent=1 // pred_fallthru
      _

</llo_original>
